<compile_context>
chip_gen: v5e
topology: v5e:2x2
jax: 0.10.0
libtpu: 0.0.40
codegen_flags: <defaults>
</compile_context>

<pallas_src>
import functools

import jax
import jax.numpy as jnp
from jax.experimental import pallas as pl
from jax.experimental.pallas import tpu as pltpu


def _round_up(x, m):
    return ((x + m - 1) // m) * m


def _padded_bytes(shape, itemsize):
    """VMEM residency upper bound: last dim padded to 128 lanes, 2nd-last to 8."""
    s = list(shape)
    if len(s) >= 1:
        s[-1] = _round_up(s[-1], 128)
    if len(s) >= 2:
        s[-2] = _round_up(s[-2], 8)
    n = 1
    for d in s:
        n *= d
    return n * itemsize


def _recurrent_vmem_bytes(T, bblk, hidden_p, input_size, proj_item, rec_item):
    f32b = 4
    total = 0
    total += 2 * _padded_bytes((T, bblk, input_size), proj_item)   # x (2 bufs)
    total += 2 * _padded_bytes((1, bblk, hidden_p), f32b)          # h0 (2 bufs)
    total += 1 * _padded_bytes((input_size, hidden_p), proj_item)  # W_ih^T (1 buf)
    total += 1 * _padded_bytes((hidden_p, hidden_p), rec_item)     # W_hh^T (1 buf)
    total += 3 * _padded_bytes((1, hidden_p), f32b)                # bias,m0,m1 (1 buf)
    total += 2 * _padded_bytes((T, bblk, hidden_p), f32b)          # out (2 bufs)
    total += 2 * _padded_bytes((1, bblk, hidden_p), f32b)          # hn (2 bufs)
    total += _padded_bytes((bblk, hidden_p), f32b)                 # h scratch
    total += _padded_bytes((T, bblk, hidden_p), f32b)              # xproj scratch
    return total


def _pick_unroll(T):
    if T <= 16:
        return T
    for u in (8, 4, 2):
        if T % u == 0:
            return u
    return 1


# ----------------------------------------------------------------------------
# Fused kernel: per chunk of T timesteps
#   1) xproj = x_chunk @ W_ih^T + (b_ih + b_hh)     (one MXU GEMM, VMEM scratch)
#   2) for t in chunk: h = tanh(xproj[t] + h @ W_hh^T); out[t] = mask0 * h
# Hidden state h is carried in a VMEM scratch across grid steps (chunks).
# Grid = (nb, num_chunks): leading "parallel" axis splits the batch (megacore),
# trailing "arbitrary" axis is the serial recurrence over chunks.
# ----------------------------------------------------------------------------
def fused_rnn_kernel(x_ref, h0_ref, wih_t_ref, whh_t_ref, bias_ref,
                     m0_ref, m1_ref, out_ref, hn_ref,
                     h_scratch, xp_scratch, *, T, seq, unroll):
    c = pl.program_id(1)

    @pl.when(c == 0)
    def _():
        h_scratch[...] = h0_ref[0].astype(jnp.float32)

    # --- fused input projection for this chunk (one lane-dense GEMM) ---
    xb = x_ref[...]                                        # (T, bblk, input)
    Tb, bblk, insz = xb.shape
    xp2d = jnp.dot(xb.reshape(Tb * bblk, insz), wih_t_ref[...],
                   preferred_element_type=jnp.float32) + bias_ref[...]
    xp_scratch[...] = xp2d.reshape(Tb, bblk, -1)           # (T, bblk, hidden_p) f32

    h = h_scratch[...]                                     # (bblk, hidden_p) f32
    whh_t = whh_t_ref[...]                                 # (hidden_p, hidden_p)
    # Hoist broadcasts out of the time loop (JAX does not CSE broadcast_in_dim).
    m0b = jnp.broadcast_to(m0_ref[...], h.shape)

    base_t = c * T

    def step(i, h):
        pre = xp_scratch[i] + jnp.dot(
            h.astype(whh_t.dtype), whh_t, preferred_element_type=jnp.float32)
        h_new = jnp.tanh(pre)
        if seq % T != 0:  # static: only emit the guard if seq was padded
            h_new = jnp.where((base_t + i) < seq, h_new, h)
        out_ref[i] = (h_new * m0b).astype(out_ref.dtype)   # lane-dense row slab
        return h_new

    h = jax.lax.fori_loop(0, T, step, h, unroll=unroll)
    h_scratch[...] = h

    @pl.when(c == pl.num_programs(1) - 1)
    def _():
        m1b = jnp.broadcast_to(m1_ref[...], h.shape)
        hn_ref[0] = (h * m1b).astype(hn_ref.dtype)


# ----------------------------------------------------------------------------
# Wrapper
# ----------------------------------------------------------------------------
def masked_rnn_forward(x, hx, w_ih, w_hh, b_ih, b_hh, mask0, mask1,
                       *, proj_dtype=jnp.float32, rec_dtype=jnp.float32,
                       t_chunk=64):
    """x: (seq, batch, input)   hx: (1, batch, hidden)
       w_ih: (hidden, input)    w_hh: (hidden, hidden)
       b_ih, b_hh, mask0, mask1: (hidden,)
       returns [mask0 * output, mask1 * h_n]  (same semantics as the module).

       proj_dtype: MXU operand dtype for the non-recurrent x @ W_ih^T GEMM
                   (bf16 is safe/recommended on v6e/v7x).
       rec_dtype : MXU operand dtype for the recurrent h @ W_hh^T matmul;
                   keep f32 for long sequences (error compounds otherwise)."""
    seq, batch, input_size = x.shape
    hidden = w_ih.shape[0]
    f32 = jnp.float32

    # Lane/sublane-dense padding.
    batch_p = _round_up(batch, 8)
    hidden_p = _round_up(hidden, 128)

    # Two-way batch split across TensorCores (v7x megacore); harmless elsewhere.
    if batch_p >= 16 and batch_p % 16 == 0:
        nb, bblk = 2, batch_p // 2
    else:
        nb, bblk = 1, batch_p

    proj_item = jnp.dtype(proj_dtype).itemsize
    rec_item = jnp.dtype(rec_dtype).itemsize

    # Chunk length: big enough to amortize per-grid-step overhead (~0.35us),
    # small enough to fit a conservative VMEM budget (safe wrt v7x's 64 MiB).
    T = max(1, min(seq, t_chunk))
    budget = 48 * 1024 * 1024
    while (_recurrent_vmem_bytes(T, bblk, hidden_p, input_size,
                                 proj_item, rec_item) > budget and T > 8):
        T = max(8, T // 2)
    num_chunks = -(-seq // T)
    seq_pad = num_chunks * T
    unroll = _pick_unroll(T)

    x = jnp.asarray(x, f32)
    hx = jnp.asarray(hx, f32)

    # Skip zero-pad copies when shapes are already aligned (pure HBM savings).
    if seq_pad != seq or batch_p != batch:
        x_p = jnp.zeros((seq_pad, batch_p, input_size), f32).at[:seq, :batch].set(x)
    else:
        x_p = x
    if batch_p != batch or hidden_p != hidden:
        h0_p = jnp.zeros((1, batch_p, hidden_p), f32).at[:, :batch, :hidden].set(hx)
    else:
        h0_p = hx

    if hidden_p != hidden:
        wih_t = jnp.zeros((input_size, hidden_p), f32).at[:, :hidden].set(
            jnp.asarray(w_ih, f32).T)
        whh_t = jnp.zeros((hidden_p, hidden_p), f32).at[:hidden, :hidden].set(
            jnp.asarray(w_hh, f32).T)
        bias = jnp.zeros((1, hidden_p), f32).at[0, :hidden].set(
            jnp.asarray(b_ih, f32) + jnp.asarray(b_hh, f32))   # folded biases
        m0 = jnp.zeros((1, hidden_p), f32).at[0, :hidden].set(jnp.asarray(mask0, f32))
        m1 = jnp.zeros((1, hidden_p), f32).at[0, :hidden].set(jnp.asarray(mask1, f32))
    else:
        wih_t = jnp.asarray(w_ih, f32).T
        whh_t = jnp.asarray(w_hh, f32).T
        bias = (jnp.asarray(b_ih, f32) + jnp.asarray(b_hh, f32)).reshape(1, hidden)
        m0 = jnp.asarray(mask0, f32).reshape(1, hidden)
        m1 = jnp.asarray(mask1, f32).reshape(1, hidden)

    # MXU operand casts; accumulation / carry / tanh / masking stay f32.
    x_p = x_p.astype(proj_dtype)
    wih_t_c = wih_t.astype(proj_dtype)
    whh_t_c = whh_t.astype(rec_dtype)

    vmem_need = _recurrent_vmem_bytes(T, bblk, hidden_p, input_size,
                                      proj_item, rec_item)
    vmem_limit = min(int(vmem_need * 1.5) + (4 << 20), 100 << 20)

    kernel = functools.partial(fused_rnn_kernel, T=T, seq=seq, unroll=unroll)
    buf1 = pl.Buffered(1)  # constant-index blocks: no double-buffering needed
    out_p, hn_p = pl.pallas_call(
        kernel,
        out_shape=(
            jax.ShapeDtypeStruct((seq_pad, batch_p, hidden_p), f32),
            jax.ShapeDtypeStruct((1, batch_p, hidden_p), f32),
        ),
        grid_spec=pltpu.PrefetchScalarGridSpec(
            num_scalar_prefetch=0,
            grid=(nb, num_chunks),
            in_specs=[
                pl.BlockSpec((T, bblk, input_size), lambda b, c: (c, b, 0)),   # x chunk
                pl.BlockSpec((1, bblk, hidden_p), lambda b, c: (0, b, 0)),     # h0
                pl.BlockSpec((input_size, hidden_p), lambda b, c: (0, 0),
                             pipeline_mode=buf1),                              # W_ih^T
                pl.BlockSpec((hidden_p, hidden_p), lambda b, c: (0, 0),
                             pipeline_mode=buf1),                              # W_hh^T
                pl.BlockSpec((1, hidden_p), lambda b, c: (0, 0),
                             pipeline_mode=buf1),                              # bias
                pl.BlockSpec((1, hidden_p), lambda b, c: (0, 0),
                             pipeline_mode=buf1),                              # mask0
                pl.BlockSpec((1, hidden_p), lambda b, c: (0, 0),
                             pipeline_mode=buf1),                              # mask1
            ],
            out_specs=[
                pl.BlockSpec((T, bblk, hidden_p), lambda b, c: (c, b, 0)),     # masked out
                pl.BlockSpec((1, bblk, hidden_p), lambda b, c: (0, b, 0)),     # masked h_n
            ],
            scratch_shapes=[
                pltpu.VMEM((bblk, hidden_p), f32),       # h carry
                pltpu.VMEM((T, bblk, hidden_p), f32),    # fused X_proj chunk
            ],
        ),
        compiler_params=pltpu.CompilerParams(
            dimension_semantics=("parallel", "arbitrary"),
            vmem_limit_bytes=vmem_limit),
    )(x_p, h0_p, wih_t_c, whh_t_c, bias, m0, m1)

    # Slice padding off.
    out = out_p[:seq, :batch, :hidden]
    hn = hn_p[:, :batch, :hidden]
    return [out, hn]


def _reference(x, hx, w_ih, w_hh, b_ih, b_hh, mask0, mask1):
    # Pure-JAX reference mirroring torch.nn.RNN (tanh) + masking.
    def step(h, x_t):
        h_new = jnp.tanh(x_t @ w_ih.T + b_ih + h @ w_hh.T + b_hh)
        return h_new, h_new
    h_last, outs = jax.lax.scan(step, hx[0], x)
    return [mask0 * outs, mask1 * h_last[None]]


if __name__ == "__main__":
    def make_case(key, seq, batch, input_size, hidden):
        k = jax.random.split(key, 6)
        scale = 1.0 / jnp.sqrt(hidden)
        x = jax.random.normal(k[0], (seq, batch, input_size), jnp.float32)
        hx = jax.random.normal(k[1], (1, batch, hidden), jnp.float32)
        w_ih = jax.random.uniform(k[2], (hidden, input_size), jnp.float32, -scale, scale)
        w_hh = jax.random.uniform(k[3], (hidden, hidden), jnp.float32, -scale, scale)
        b_ih = jax.random.uniform(k[4], (hidden,), jnp.float32, -scale, scale)
        b_hh = jax.random.uniform(k[5], (hidden,), jnp.float32, -scale, scale)
        mask0 = (jnp.arange(hidden) % 2 == 0).astype(jnp.float32)
        mask1 = (jnp.arange(hidden) % 3 != 0).astype(jnp.float32)
        return (x, hx, w_ih, w_hh, b_ih, b_hh, mask0, mask1)

    # Case 1: module-default small shapes (seq=8, batch=2, input=4, hidden=32).
    args1 = make_case(jax.random.PRNGKey(0), 8, 2, 4, 32)
    ref1 = _reference(*args1)
    res1 = [jax.block_until_ready(r) for r in masked_rnn_forward(*args1)]
    for got, want in zip(res1, ref1):
        assert got.shape == want.shape
        assert jnp.allclose(got, want, atol=1e-5, rtol=1e-5)

    # Case 2: exercises the 2-way batch split (megacore) + ragged seq chunking.
    args2 = make_case(jax.random.PRNGKey(1), 20, 16, 8, 32)
    ref2 = _reference(*args2)
    res2 = [jax.block_until_ready(r)
            for r in masked_rnn_forward(*args2, t_chunk=8)]
    for got, want in zip(res2, ref2):
        assert got.shape == want.shape
        assert jnp.allclose(got, want, atol=1e-5, rtol=1e-5)

    # Case 3: bf16 operands for the non-recurrent projection GEMM only
    # (recurrent matmul stays f32 so error does not compound with seq).
    res3 = [jax.block_until_ready(r)
            for r in masked_rnn_forward(*args1, proj_dtype=jnp.bfloat16)]
    for got, want in zip(res3, ref1):
        assert got.shape == want.shape
        assert jnp.allclose(got, want, atol=2e-2, rtol=2e-2)

    print("KERNEL_OK")
</pallas_src>

<mosaic_0001>
module attributes {stable_mosaic.version = 11 : i64} {
  func.func @fused_rnn_kernel(%arg0: i32, %arg1: i32, %arg2: memref<8x8x4xf32, #tpu.memory_space<vmem>>, %arg3: memref<1x8x128xf32, #tpu.memory_space<vmem>>, %arg4: memref<4x128xf32, #tpu.memory_space<vmem>>, %arg5: memref<128x128xf32, #tpu.memory_space<vmem>>, %arg6: memref<1x128xf32, #tpu.memory_space<vmem>>, %arg7: memref<1x128xf32, #tpu.memory_space<vmem>>, %arg8: memref<1x128xf32, #tpu.memory_space<vmem>>, %arg9: memref<8x8x128xf32, #tpu.memory_space<vmem>>, %arg10: memref<1x8x128xf32, #tpu.memory_space<vmem>>, %arg11: memref<8x128xf32, #tpu.memory_space<vmem>>, %arg12: memref<8x8x128xf32, #tpu.memory_space<vmem>>) attributes {dimension_semantics = [#tpu.dimension_semantics<parallel>, #tpu.dimension_semantics<arbitrary>], iteration_bounds = array<i64: 1, 1>, scalar_prefetch = 0 : i64, scratch_operands = 2 : i64, tpu.core_type = #tpu.core_type<tc>, window_params = [{transform_indices = @transform_0, window_bounds = array<i64: 8, 8, 4>}, {transform_indices = @transform_1, window_bounds = array<i64: 1, 8, 128>}, {pipeline_mode = #tpu.pipeline_mode<synchronous>, transform_indices = @transform_2, window_bounds = array<i64: 4, 128>}, {pipeline_mode = #tpu.pipeline_mode<synchronous>, transform_indices = @transform_3, window_bounds = array<i64: 128, 128>}, {pipeline_mode = #tpu.pipeline_mode<synchronous>, transform_indices = @transform_4, window_bounds = array<i64: 1, 128>}, {pipeline_mode = #tpu.pipeline_mode<synchronous>, transform_indices = @transform_5, window_bounds = array<i64: 1, 128>}, {pipeline_mode = #tpu.pipeline_mode<synchronous>, transform_indices = @transform_6, window_bounds = array<i64: 1, 128>}, {transform_indices = @transform_7, window_bounds = array<i64: 8, 8, 128>}, {transform_indices = @transform_8, window_bounds = array<i64: 1, 8, 128>}]} {
    %c0_i32 = arith.constant 0 : i32
    %0 = arith.cmpi eq, %arg1, %c0_i32 : i32
    %1 = arith.extui %0 : i1 to i32
    %c0_i32_0 = arith.constant 0 : i32
    %2 = arith.cmpi ne, %1, %c0_i32_0 : i32
    scf.if %2 {
      %c0_61 = arith.constant 0 : index
      %c0_62 = arith.constant 0 : index
      %c0_63 = arith.constant 0 : index
      %109 = vector.load %arg3[%c0_61, %c0_62, %c0_63] : memref<1x8x128xf32, #tpu.memory_space<vmem>>, vector<1x8x128xf32>
      %110 = vector.shape_cast %109 : vector<1x8x128xf32> to vector<8x128xf32>
      %c0_64 = arith.constant 0 : index
      %c0_65 = arith.constant 0 : index
      %111 = vector.load %arg11[%c0_64, %c0_65] : memref<8x128xf32, #tpu.memory_space<vmem>>, vector<8x128xf32>
      tpu.vector_store %arg11[%c0_64, %c0_65], %110 {strides = array<i32>} : memref<8x128xf32, #tpu.memory_space<vmem>>, vector<8x128xf32>,
    } else {
    }
    %c0 = arith.constant 0 : index
    %c0_1 = arith.constant 0 : index
    %c0_2 = arith.constant 0 : index
    %3 = vector.load %arg2[%c0, %c0_1, %c0_2] : memref<8x8x4xf32, #tpu.memory_space<vmem>>, vector<8x8x4xf32>
    %4 = vector.shape_cast %3 : vector<8x8x4xf32> to vector<64x4xf32>
    %c0_3 = arith.constant 0 : index
    %c0_4 = arith.constant 0 : index
    %5 = vector.load %arg4[%c0_3, %c0_4] : memref<4x128xf32, #tpu.memory_space<vmem>>, vector<4x128xf32>
    %cst = arith.constant dense<0.000000e+00> : vector<64x128xf32>
    %6 = tpu.matmul %4, %5, %cst {dimension_numbers = #tpu.dot_dimension_numbers<[1], [0], [0], [1], [0, 0, 1, 1], [], []>} : vector<64x4xf32>, vector<4x128xf32>, vector<64x128xf32> -> vector<64x128xf32>
    %c0_5 = arith.constant 0 : index
    %c0_6 = arith.constant 0 : index
    %7 = vector.load %arg6[%c0_5, %c0_6] : memref<1x128xf32, #tpu.memory_space<vmem>>, vector<1x128xf32>
    %8 = vector.broadcast %7 : vector<1x128xf32> to vector<64x128xf32>
    %9 = arith.addf %6, %8 : vector<64x128xf32>
    %10 = vector.shape_cast %9 : vector<64x128xf32> to vector<8x8x128xf32>
    %c0_7 = arith.constant 0 : index
    %c0_8 = arith.constant 0 : index
    %c0_9 = arith.constant 0 : index
    %11 = vector.load %arg12[%c0_7, %c0_8, %c0_9] : memref<8x8x128xf32, #tpu.memory_space<vmem>>, vector<8x8x128xf32>
    tpu.vector_store %arg12[%c0_7, %c0_8, %c0_9], %10 {strides = array<i32>} : memref<8x8x128xf32, #tpu.memory_space<vmem>>, vector<8x8x128xf32>,
    %c0_10 = arith.constant 0 : index
    %c0_11 = arith.constant 0 : index
    %12 = vector.load %arg11[%c0_10, %c0_11] : memref<8x128xf32, #tpu.memory_space<vmem>>, vector<8x128xf32>
    %c0_12 = arith.constant 0 : index
    %c0_13 = arith.constant 0 : index
    %13 = vector.load %arg5[%c0_12, %c0_13] : memref<128x128xf32, #tpu.memory_space<vmem>>, vector<128x128xf32>
    %c0_14 = arith.constant 0 : index
    %c0_15 = arith.constant 0 : index
    %14 = vector.load %arg7[%c0_14, %c0_15] : memref<1x128xf32, #tpu.memory_space<vmem>>, vector<1x128xf32>
    %15 = vector.shape_cast %14 : vector<1x128xf32> to vector<1x128xf32>
    %16 = vector.broadcast %15 : vector<1x128xf32> to vector<8x128xf32>
    %c0_i32_16 = arith.constant 0 : i32
    %17 = arith.index_cast %c0_i32_16 : i32 to index
    %c0_17 = arith.constant 0 : index
    %c0_18 = arith.constant 0 : index
    %18 = vector.load %arg12[%17, %c0_17, %c0_18] : memref<8x8x128xf32, #tpu.memory_space<vmem>>, vector<1x8x128xf32>
    %19 = vector.shape_cast %18 : vector<1x8x128xf32> to vector<8x128xf32>
    %cst_19 = arith.constant dense<0.000000e+00> : vector<8x128xf32>
    %20 = tpu.matmul %12, %13, %cst_19 {dimension_numbers = #tpu.dot_dimension_numbers<[1], [0], [0], [1], [0, 0, 1, 1], [], []>} : vector<8x128xf32>, vector<128x128xf32>, vector<8x128xf32> -> vector<8x128xf32>
    %21 = arith.addf %19, %20 : vector<8x128xf32>
    %22 = math.tanh %21 : vector<8x128xf32>
    %23 = arith.mulf %22, %16 : vector<8x128xf32>
    %24 = arith.index_cast %c0_i32_16 : i32 to index
    %c0_20 = arith.constant 0 : index
    %c0_21 = arith.constant 0 : index
    %25 = vector.load %arg9[%24, %c0_20, %c0_21] : memref<8x8x128xf32, #tpu.memory_space<vmem>>, vector<1x8x128xf32>
    %26 = vector.shape_cast %25 : vector<1x8x128xf32> to vector<8x128xf32>
    %27 = vector.shape_cast %23 : vector<8x128xf32> to vector<1x8x128xf32>
    tpu.vector_store %arg9[%24, %c0_20, %c0_21], %27 {strides = array<i32>} : memref<8x8x128xf32, #tpu.memory_space<vmem>>, vector<1x8x128xf32>,
    %c1_i32 = arith.constant 1 : i32
    %28 = arith.index_cast %c1_i32 : i32 to index
    %c0_22 = arith.constant 0 : index
    %c0_23 = arith.constant 0 : index
    %29 = vector.load %arg12[%28, %c0_22, %c0_23] : memref<8x8x128xf32, #tpu.memory_space<vmem>>, vector<1x8x128xf32>
    %30 = vector.shape_cast %29 : vector<1x8x128xf32> to vector<8x128xf32>
    %cst_24 = arith.constant dense<0.000000e+00> : vector<8x128xf32>
    %31 = tpu.matmul %22, %13, %cst_24 {dimension_numbers = #tpu.dot_dimension_numbers<[1], [0], [0], [1], [0, 0, 1, 1], [], []>} : vector<8x128xf32>, vector<128x128xf32>, vector<8x128xf32> -> vector<8x128xf32>
    %32 = arith.addf %30, %31 : vector<8x128xf32>
    %33 = math.tanh %32 : vector<8x128xf32>
    %34 = arith.mulf %33, %16 : vector<8x128xf32>
    %35 = arith.index_cast %c1_i32 : i32 to index
    %c0_25 = arith.constant 0 : index
    %c0_26 = arith.constant 0 : index
    %36 = vector.load %arg9[%35, %c0_25, %c0_26] : memref<8x8x128xf32, #tpu.memory_space<vmem>>, vector<1x8x128xf32>
    %37 = vector.shape_cast %36 : vector<1x8x128xf32> to vector<8x128xf32>
    %38 = vector.shape_cast %34 : vector<8x128xf32> to vector<1x8x128xf32>
    tpu.vector_store %arg9[%35, %c0_25, %c0_26], %38 {strides = array<i32>} : memref<8x8x128xf32, #tpu.memory_space<vmem>>, vector<1x8x128xf32>,
    %c2_i32 = arith.constant 2 : i32
    %39 = arith.index_cast %c2_i32 : i32 to index
    %c0_27 = arith.constant 0 : index
    %c0_28 = arith.constant 0 : index
    %40 = vector.load %arg12[%39, %c0_27, %c0_28] : memref<8x8x128xf32, #tpu.memory_space<vmem>>, vector<1x8x128xf32>
    %41 = vector.shape_cast %40 : vector<1x8x128xf32> to vector<8x128xf32>
    %cst_29 = arith.constant dense<0.000000e+00> : vector<8x128xf32>
    %42 = tpu.matmul %33, %13, %cst_29 {dimension_numbers = #tpu.dot_dimension_numbers<[1], [0], [0], [1], [0, 0, 1, 1], [], []>} : vector<8x128xf32>, vector<128x128xf32>, vector<8x128xf32> -> vector<8x128xf32>
    %43 = arith.addf %41, %42 : vector<8x128xf32>
    %44 = math.tanh %43 : vector<8x128xf32>
    %45 = arith.mulf %44, %16 : vector<8x128xf32>
    %46 = arith.index_cast %c2_i32 : i32 to index
    %c0_30 = arith.constant 0 : index
    %c0_31 = arith.constant 0 : index
    %47 = vector.load %arg9[%46, %c0_30, %c0_31] : memref<8x8x128xf32, #tpu.memory_space<vmem>>, vector<1x8x128xf32>
    %48 = vector.shape_cast %47 : vector<1x8x128xf32> to vector<8x128xf32>
    %49 = vector.shape_cast %45 : vector<8x128xf32> to vector<1x8x128xf32>
    tpu.vector_store %arg9[%46, %c0_30, %c0_31], %49 {strides = array<i32>} : memref<8x8x128xf32, #tpu.memory_space<vmem>>, vector<1x8x128xf32>,
    %c3_i32 = arith.constant 3 : i32
    %50 = arith.index_cast %c3_i32 : i32 to index
    %c0_32 = arith.constant 0 : index
    %c0_33 = arith.constant 0 : index
    %51 = vector.load %arg12[%50, %c0_32, %c0_33] : memref<8x8x128xf32, #tpu.memory_space<vmem>>, vector<1x8x128xf32>
    %52 = vector.shape_cast %51 : vector<1x8x128xf32> to vector<8x128xf32>
    %cst_34 = arith.constant dense<0.000000e+00> : vector<8x128xf32>
    %53 = tpu.matmul %44, %13, %cst_34 {dimension_numbers = #tpu.dot_dimension_numbers<[1], [0], [0], [1], [0, 0, 1, 1], [], []>} : vector<8x128xf32>, vector<128x128xf32>, vector<8x128xf32> -> vector<8x128xf32>
    %54 = arith.addf %52, %53 : vector<8x128xf32>
    %55 = math.tanh %54 : vector<8x128xf32>
    %56 = arith.mulf %55, %16 : vector<8x128xf32>
    %57 = arith.index_cast %c3_i32 : i32 to index
    %c0_35 = arith.constant 0 : index
    %c0_36 = arith.constant 0 : index
    %58 = vector.load %arg9[%57, %c0_35, %c0_36] : memref<8x8x128xf32, #tpu.memory_space<vmem>>, vector<1x8x128xf32>
    %59 = vector.shape_cast %58 : vector<1x8x128xf32> to vector<8x128xf32>
    %60 = vector.shape_cast %56 : vector<8x128xf32> to vector<1x8x128xf32>
    tpu.vector_store %arg9[%57, %c0_35, %c0_36], %60 {strides = array<i32>} : memref<8x8x128xf32, #tpu.memory_space<vmem>>, vector<1x8x128xf32>,
    %c4_i32 = arith.constant 4 : i32
    %61 = arith.index_cast %c4_i32 : i32 to index
    %c0_37 = arith.constant 0 : index
    %c0_38 = arith.constant 0 : index
    %62 = vector.load %arg12[%61, %c0_37, %c0_38] : memref<8x8x128xf32, #tpu.memory_space<vmem>>, vector<1x8x128xf32>
    %63 = vector.shape_cast %62 : vector<1x8x128xf32> to vector<8x128xf32>
    %cst_39 = arith.constant dense<0.000000e+00> : vector<8x128xf32>
    %64 = tpu.matmul %55, %13, %cst_39 {dimension_numbers = #tpu.dot_dimension_numbers<[1], [0], [0], [1], [0, 0, 1, 1], [], []>} : vector<8x128xf32>, vector<128x128xf32>, vector<8x128xf32> -> vector<8x128xf32>
    %65 = arith.addf %63, %64 : vector<8x128xf32>
    %66 = math.tanh %65 : vector<8x128xf32>
    %67 = arith.mulf %66, %16 : vector<8x128xf32>
    %68 = arith.index_cast %c4_i32 : i32 to index
    %c0_40 = arith.constant 0 : index
    %c0_41 = arith.constant 0 : index
    %69 = vector.load %arg9[%68, %c0_40, %c0_41] : memref<8x8x128xf32, #tpu.memory_space<vmem>>, vector<1x8x128xf32>
    %70 = vector.shape_cast %69 : vector<1x8x128xf32> to vector<8x128xf32>
    %71 = vector.shape_cast %67 : vector<8x128xf32> to vector<1x8x128xf32>
    tpu.vector_store %arg9[%68, %c0_40, %c0_41], %71 {strides = array<i32>} : memref<8x8x128xf32, #tpu.memory_space<vmem>>, vector<1x8x128xf32>,
    %c5_i32 = arith.constant 5 : i32
    %72 = arith.index_cast %c5_i32 : i32 to index
    %c0_42 = arith.constant 0 : index
    %c0_43 = arith.constant 0 : index
    %73 = vector.load %arg12[%72, %c0_42, %c0_43] : memref<8x8x128xf32, #tpu.memory_space<vmem>>, vector<1x8x128xf32>
    %74 = vector.shape_cast %73 : vector<1x8x128xf32> to vector<8x128xf32>
    %cst_44 = arith.constant dense<0.000000e+00> : vector<8x128xf32>
    %75 = tpu.matmul %66, %13, %cst_44 {dimension_numbers = #tpu.dot_dimension_numbers<[1], [0], [0], [1], [0, 0, 1, 1], [], []>} : vector<8x128xf32>, vector<128x128xf32>, vector<8x128xf32> -> vector<8x128xf32>
    %76 = arith.addf %74, %75 : vector<8x128xf32>
    %77 = math.tanh %76 : vector<8x128xf32>
    %78 = arith.mulf %77, %16 : vector<8x128xf32>
    %79 = arith.index_cast %c5_i32 : i32 to index
    %c0_45 = arith.constant 0 : index
    %c0_46 = arith.constant 0 : index
    %80 = vector.load %arg9[%79, %c0_45, %c0_46] : memref<8x8x128xf32, #tpu.memory_space<vmem>>, vector<1x8x128xf32>
    %81 = vector.shape_cast %80 : vector<1x8x128xf32> to vector<8x128xf32>
    %82 = vector.shape_cast %78 : vector<8x128xf32> to vector<1x8x128xf32>
    tpu.vector_store %arg9[%79, %c0_45, %c0_46], %82 {strides = array<i32>} : memref<8x8x128xf32, #tpu.memory_space<vmem>>, vector<1x8x128xf32>,
    %c6_i32 = arith.constant 6 : i32
    %83 = arith.index_cast %c6_i32 : i32 to index
    %c0_47 = arith.constant 0 : index
    %c0_48 = arith.constant 0 : index
    %84 = vector.load %arg12[%83, %c0_47, %c0_48] : memref<8x8x128xf32, #tpu.memory_space<vmem>>, vector<1x8x128xf32>
    %85 = vector.shape_cast %84 : vector<1x8x128xf32> to vector<8x128xf32>
    %cst_49 = arith.constant dense<0.000000e+00> : vector<8x128xf32>
    %86 = tpu.matmul %77, %13, %cst_49 {dimension_numbers = #tpu.dot_dimension_numbers<[1], [0], [0], [1], [0, 0, 1, 1], [], []>} : vector<8x128xf32>, vector<128x128xf32>, vector<8x128xf32> -> vector<8x128xf32>
    %87 = arith.addf %85, %86 : vector<8x128xf32>
    %88 = math.tanh %87 : vector<8x128xf32>
    %89 = arith.mulf %88, %16 : vector<8x128xf32>
    %90 = arith.index_cast %c6_i32 : i32 to index
    %c0_50 = arith.constant 0 : index
    %c0_51 = arith.constant 0 : index
    %91 = vector.load %arg9[%90, %c0_50, %c0_51] : memref<8x8x128xf32, #tpu.memory_space<vmem>>, vector<1x8x128xf32>
    %92 = vector.shape_cast %91 : vector<1x8x128xf32> to vector<8x128xf32>
    %93 = vector.shape_cast %89 : vector<8x128xf32> to vector<1x8x128xf32>
    tpu.vector_store %arg9[%90, %c0_50, %c0_51], %93 {strides = array<i32>} : memref<8x8x128xf32, #tpu.memory_space<vmem>>, vector<1x8x128xf32>,
    %c7_i32 = arith.constant 7 : i32
    %94 = arith.index_cast %c7_i32 : i32 to index
    %c0_52 = arith.constant 0 : index
    %c0_53 = arith.constant 0 : index
    %95 = vector.load %arg12[%94, %c0_52, %c0_53] : memref<8x8x128xf32, #tpu.memory_space<vmem>>, vector<1x8x128xf32>
    %96 = vector.shape_cast %95 : vector<1x8x128xf32> to vector<8x128xf32>
    %cst_54 = arith.constant dense<0.000000e+00> : vector<8x128xf32>
    %97 = tpu.matmul %88, %13, %cst_54 {dimension_numbers = #tpu.dot_dimension_numbers<[1], [0], [0], [1], [0, 0, 1, 1], [], []>} : vector<8x128xf32>, vector<128x128xf32>, vector<8x128xf32> -> vector<8x128xf32>
    %98 = arith.addf %96, %97 : vector<8x128xf32>
    %99 = math.tanh %98 : vector<8x128xf32>
    %100 = arith.mulf %99, %16 : vector<8x128xf32>
    %101 = arith.index_cast %c7_i32 : i32 to index
    %c0_55 = arith.constant 0 : index
    %c0_56 = arith.constant 0 : index
    %102 = vector.load %arg9[%101, %c0_55, %c0_56] : memref<8x8x128xf32, #tpu.memory_space<vmem>>, vector<1x8x128xf32>
    %103 = vector.shape_cast %102 : vector<1x8x128xf32> to vector<8x128xf32>
    %104 = vector.shape_cast %100 : vector<8x128xf32> to vector<1x8x128xf32>
    tpu.vector_store %arg9[%101, %c0_55, %c0_56], %104 {strides = array<i32>} : memref<8x8x128xf32, #tpu.memory_space<vmem>>, vector<1x8x128xf32>,
    %c8_i32 = arith.constant 8 : i32
    %c0_57 = arith.constant 0 : index
    %c0_58 = arith.constant 0 : index
    %105 = vector.load %arg11[%c0_57, %c0_58] : memref<8x128xf32, #tpu.memory_space<vmem>>, vector<8x128xf32>
    tpu.vector_store %arg11[%c0_57, %c0_58], %99 {strides = array<i32>} : memref<8x128xf32, #tpu.memory_space<vmem>>, vector<8x128xf32>,
    %c0_i32_59 = arith.constant 0 : i32
    %106 = arith.cmpi eq, %arg1, %c0_i32_59 : i32
    %107 = arith.extui %106 : i1 to i32
    %c0_i32_60 = arith.constant 0 : i32
    %108 = arith.cmpi ne, %107, %c0_i32_60 : i32
    scf.if %108 {
      %c0_61 = arith.constant 0 : index
      %c0_62 = arith.constant 0 : index
      %109 = vector.load %arg8[%c0_61, %c0_62] : memref<1x128xf32, #tpu.memory_space<vmem>>, vector<1x128xf32>
      %110 = vector.shape_cast %109 : vector<1x128xf32> to vector<1x128xf32>
      %111 = vector.broadcast %110 : vector<1x128xf32> to vector<8x128xf32>
      %112 = arith.mulf %99, %111 : vector<8x128xf32>
      %c0_63 = arith.constant 0 : index
      %c0_64 = arith.constant 0 : index
      %c0_65 = arith.constant 0 : index
      %113 = vector.load %arg10[%c0_63, %c0_64, %c0_65] : memref<1x8x128xf32, #tpu.memory_space<vmem>>, vector<1x8x128xf32>
      %114 = vector.shape_cast %113 : vector<1x8x128xf32> to vector<8x128xf32>
      %115 = vector.shape_cast %112 : vector<8x128xf32> to vector<1x8x128xf32>
      tpu.vector_store %arg10[%c0_63, %c0_64, %c0_65], %115 {strides = array<i32>} : memref<1x8x128xf32, #tpu.memory_space<vmem>>, vector<1x8x128xf32>,
    } else {
    }
    return
  }
  func.func @transform_0(%arg0: i32, %arg1: i32) -> (i32, i32, i32) {
    %c0_i32 = arith.constant 0 : i32
    %c0_i32_0 = arith.constant 0 : i32
    return %arg1, %arg0, %c0_i32 : i32, i32, i32
  }
  func.func @transform_1(%arg0: i32, %arg1: i32) -> (i32, i32, i32) {
    %c0_i32 = arith.constant 0 : i32
    %c0_i32_0 = arith.constant 0 : i32
    %c0_i32_1 = arith.constant 0 : i32
    return %c0_i32, %arg0, %c0_i32_0 : i32, i32, i32
  }
  func.func @transform_2(%arg0: i32, %arg1: i32) -> (i32, i32) {
    %c0_i32 = arith.constant 0 : i32
    %c0_i32_0 = arith.constant 0 : i32
    %c0_i32_1 = arith.constant 0 : i32
    return %c0_i32, %c0_i32_0 : i32, i32
  }
  func.func @transform_3(%arg0: i32, %arg1: i32) -> (i32, i32) {
    %c0_i32 = arith.constant 0 : i32
    %c0_i32_0 = arith.constant 0 : i32
    %c0_i32_1 = arith.constant 0 : i32
    return %c0_i32, %c0_i32_0 : i32, i32
  }
  func.func @transform_4(%arg0: i32, %arg1: i32) -> (i32, i32) {
    %c0_i32 = arith.constant 0 : i32
    %c0_i32_0 = arith.constant 0 : i32
    %c0_i32_1 = arith.constant 0 : i32
    return %c0_i32, %c0_i32_0 : i32, i32
  }
  func.func @transform_5(%arg0: i32, %arg1: i32) -> (i32, i32) {
    %c0_i32 = arith.constant 0 : i32
    %c0_i32_0 = arith.constant 0 : i32
    %c0_i32_1 = arith.constant 0 : i32
    return %c0_i32, %c0_i32_0 : i32, i32
  }
  func.func @transform_6(%arg0: i32, %arg1: i32) -> (i32, i32) {
    %c0_i32 = arith.constant 0 : i32
    %c0_i32_0 = arith.constant 0 : i32
    %c0_i32_1 = arith.constant 0 : i32
    return %c0_i32, %c0_i32_0 : i32, i32
  }
  func.func @transform_7(%arg0: i32, %arg1: i32) -> (i32, i32, i32) {
    %c0_i32 = arith.constant 0 : i32
    %c0_i32_0 = arith.constant 0 : i32
    return %arg1, %arg0, %c0_i32 : i32, i32, i32
  }
  func.func @transform_8(%arg0: i32, %arg1: i32) -> (i32, i32, i32) {
    %c0_i32 = arith.constant 0 : i32
    %c0_i32_0 = arith.constant 0 : i32
    %c0_i32_1 = arith.constant 0 : i32
    return %c0_i32, %arg0, %c0_i32_0 : i32, i32, i32
  }
}

</mosaic_0001>

<llo_original>
// kernel: tpu_custom_call.1
$region0: #{tpu_custom_call.1}
  #allocation0 [shape = 'u32[]', space=smem, size = 0x4, offset = 0x4, fixed_abs, tag = 'smem constant byte address 0x4 - core index']
  #allocation1 [shape = 'u32[72,128]{1,0:T(1,128)}', space=vmem, size = 0x9000, scoped, tag = 'internal scratch']
  #allocation2 [shape = 'f32[8,128]{1,0:T(8,128)}', space=vmem, size = 0x1000, scoped, tag = 'scratch operand']
  #allocation3 [shape = 'f32[8,8,128]{2,1,0:T(8,128)}', space=vmem, size = 0x8000, scoped, tag = 'scratch operand']
  %s0 = inlined_call_operand.vmem [shape: f32[8,8,4], index: 0, kind: input, shape index: {}]
  %s1 = inlined_call_operand.vmem [shape: f32[1,8,128], index: 1, kind: input, shape index: {}]
  %s2 = inlined_call_operand.vmem [shape: f32[4,128], index: 2, kind: input, shape index: {}]
  %s3 = inlined_call_operand.hbm [shape: f32[128,128], index: 3, kind: input, shape index: {}]
  %s4 = inlined_call_operand.vmem [shape: f32[1,128], index: 4, kind: input, shape index: {}]
  %s5 = inlined_call_operand.vmem [shape: f32[1,128], index: 5, kind: input, shape index: {}]
  %s6 = inlined_call_operand.vmem [shape: f32[1,128], index: 6, kind: input, shape index: {}]
  %s7 = inlined_call_operand.hbm [shape: f32[8,8,128], index: 7, kind: output, shape index: {0}]
  %s8 = inlined_call_operand.hbm [shape: f32[1,8,128], index: 8, kind: output, shape index: {1}]
  %9 = xla_tuple %s7, %s8
  %s10 = sld [smem:[#allocation0]]
  $region58: #{tpu_custom_call.1} parent=0
    _
  %s12 = ssub.s32 1, %s10
  %s13 = scalar_select 0, %s12, %s10
  $region1: #{tpu_custom_call.1} parent=0
    #allocation4 [shape = 'u8[65536]{0}', space=vmem, size = 0x10000, scoped, tag = 'input window, operand 3, single buffered']
    #allocation5 [shape = 's32[1]{0}', space=sflag, size = 0x4, scoped, tag = 'scoped memory for tpu_custom_call.1']
    #allocation6 [shape = 's32[1]{0}', space=sflag, size = 0x4, scoped, tag = 'scoped memory for tpu_custom_call.1']
    #allocation7 [shape = 'u8[32768]{0}', space=vmem, size = 0x8000, scoped, tag = 'output window, operand 0, single buffered']
    #allocation8 [shape = 'u8[4096]{0}', space=vmem, size = 0x1000, scoped, tag = 'output window, operand 1, single buffered']
    #allocation9 [shape = 's32[1]{0}', space=sflag, size = 0x4, scoped, tag = 'scoped memory for tpu_custom_call.1']
    %14 = vsyncpa [#allocation5], 0
    %15 = vsyncpa [#allocation6], 0
    %16 = vsyncpa [#allocation9], 0
    // Predicated region
    $region2: #{tpu_custom_call.1} parent=1 // pred_check
      _
    $region3: #{tpu_custom_call.1} parent=1 // pred_check_branch
      %18 = sbr.rel (0) target = $region5
    $region4: #{tpu_custom_call.1} parent=1 // pred_region
      _
    $region5: #{tpu_custom_call.1} parent=1 // pred_fallthru
      _
    // Predicated region
    $region6: #{tpu_custom_call.1} parent=1 // pred_check
      _
    $region7: #{tpu_custom_call.1} parent=1 // pred_check_branch
      %20 = sbr.rel (0) target = $region9
    $region8: #{tpu_custom_call.1} parent=1 // pred_region
      _
    $region9: #{tpu_custom_call.1} parent=1 // pred_fallthru
      _
    // Predicated region
    $region10: #{tpu_custom_call.1} parent=1 // pred_check
      _
    $region11: #{tpu_custom_call.1} parent=1 // pred_check_branch
      %22 = sbr.rel (0) target = $region13
    $region12: #{tpu_custom_call.1} parent=1 // pred_region
      _
    $region13: #{tpu_custom_call.1} parent=1 // pred_fallthru
      _
    // Predicated region
    $region14: #{tpu_custom_call.1} parent=1 // pred_check
      _
    $region15: #{tpu_custom_call.1} parent=1 // pred_check_branch
      %24 = sbr.rel (0) target = $region17
    $region16: #{tpu_custom_call.1} parent=1 // pred_region
      %26 = vsyncadd [#allocation5], 0
      %s27 = sshll.u32 %s3, 4
      %s28 = int_to_ptr.hbm [resolvable:$true] %s27
      %s29 = sshll.u32 [#allocation4], 4
      %s30 = int_to_ptr.vmem [resolvable:$true] %s29
      %35 = dma.hbm_to_vmem [thread:$0]  %s28, 2048, %s30, [#allocation5], 128, 128, 8
    $region17: #{tpu_custom_call.1} parent=1 // pred_fallthru
      _
    // Predicated region
    $region18: #{tpu_custom_call.1} parent=1 // pred_check
      _
    $region19: #{tpu_custom_call.1} parent=1 // pred_check_branch
      %37 = sbr.rel (0) target = $region21
    $region20: #{tpu_custom_call.1} parent=1 // pred_region
      _
    $region21: #{tpu_custom_call.1} parent=1 // pred_fallthru
      _
    // Predicated region
    $region22: #{tpu_custom_call.1} parent=1 // pred_check
      _
    $region23: #{tpu_custom_call.1} parent=1 // pred_check_branch
      %39 = sbr.rel (0) target = $region25
    $region24: #{tpu_custom_call.1} parent=1 // pred_region
      _
    $region25: #{tpu_custom_call.1} parent=1 // pred_fallthru
      _
    // Predicated region
    $region26: #{tpu_custom_call.1} parent=1 // pred_check
      _
    $region27: #{tpu_custom_call.1} parent=1 // pred_check_branch
      %41 = sbr.rel (0) target = $region29
    $region28: #{tpu_custom_call.1} parent=1 // pred_region
      _
    $region29: #{tpu_custom_call.1} parent=1 // pred_fallthru
      _
    // Predicated region
    $region30: #{tpu_custom_call.1} parent=1 // pred_check
      _
    $region31: #{tpu_custom_call.1} parent=1 // pred_check_branch
      %43 = sbr.rel (0) target = $region33
    $region32: #{tpu_custom_call.1} parent=1 // pred_region
      %45 = dma.done [#allocation5], 2048
    $region33: #{tpu_custom_call.1} parent=1 // pred_fallthru
      _
    %p46 = scmp.eq.s32.totalorder 0, 0
    // Predicated region
    $region34: #{tpu_custom_call.1} parent=1 // pred_check
      %p47 = pneg %p46
    $region35: #{tpu_custom_call.1} parent=1 // pred_check_branch
      %49 = sbr.rel (%p47) target = $region37
    $region36: #{tpu_custom_call.1} parent=1 // pred_region
      %v50 = vld [vmem:[%s1] sm:$0xff]
      %51 = vst [vmem:[#allocation2] sm:$0xff] %v50
    $region37: #{tpu_custom_call.1} parent=1 // pred_fallthru
      _
    %v52 = vld [vmem:[%s0] sm:$0xff]
    %v53 = vld [vmem:[%s0 + $0x8] sm:$0xff]
    %v54 = vld [vmem:[%s0 + $0x10] sm:$0xff]
    %v55 = vld [vmem:[%s0 + $0x18] sm:$0xff]
    %v56 = vld [vmem:[%s0 + $0x20] sm:$0xff]
    %v57 = vld [vmem:[%s0 + $0x28] sm:$0xff]
    %v58 = vld [vmem:[%s0 + $0x30] sm:$0xff]
    %v59 = vld [vmem:[%s0 + $0x38] sm:$0xff]
    %v60 = vld [vmem:[%s2] sm:$0xf]
    %v61 = vld [vmem:[%s4] sm:$0x1]
    %v63 = vperm.slane %v61, 0
    %vm65 = vcmask 31744
    %v67 = vsel %vm65, %v52, 0
    %v70 = vsel %vm65, %v53, 0
    %v73 = vsel %vm65, %v54, 0
    %v76 = vsel %vm65, %v55, 0
    %v79 = vsel %vm65, %v56, 0
    %v82 = vsel %vm65, %v57, 0
    %v85 = vsel %vm65, %v58, 0
    %v88 = vsel %vm65, %v59, 0
    %vm90 = vcmask 1043456
    %v92 = vsel %vm90, %v60, 0
    %94 = vmatpush.msra.mxu0 0.0
    %95 = vmatpush.msra.mxu0 0.0
    %96 = vmatpush.msra.mxu0 0.0
    %97 = vmatpush.msra.mxu0 0.0
    %98 = vmatpush.msra.mxu0 0.0
    %99 = vmatpush.msra.mxu0 0.0
    %100 = vmatpush.msra.mxu0 0.0
    %101 = vmatpush.msra.mxu0 0.0
    %102 = vmatpush.msra.mxu0 0.0
    %103 = vmatpush.msra.mxu0 0.0
    %104 = vmatpush.msra.mxu0 0.0
    %105 = vmatpush.msra.mxu0 0.0
    %106 = vmatpush.msra.mxu0 0.0
    %107 = vmatpush.msra.mxu0 0.0
    %108 = vmatpush.msra.mxu0 0.0
    %109 = vmatpush.msra.mxu0 %v92
    %110 = vmatmul.f32.gmra.mxu0 %v67
    %v111 = vpop.f32.mrf.mxu0
    %v112 = vadd.f32 %v63, %v111
    %113 = vmatmul.f32.gmra.mxu0 %v70
    %v114 = vpop.f32.mrf.mxu0
    %v115 = vadd.f32 %v63, %v114
    %116 = vmatmul.f32.gmra.mxu0 %v73
    %v117 = vpop.f32.mrf.mxu0
    %v118 = vadd.f32 %v63, %v117
    %119 = vmatmul.f32.gmra.mxu0 %v76
    %v120 = vpop.f32.mrf.mxu0
    %v121 = vadd.f32 %v63, %v120
    %122 = vmatmul.f32.gmra.mxu0 %v79
    %v123 = vpop.f32.mrf.mxu0
    %v124 = vadd.f32 %v63, %v123
    %125 = vmatmul.f32.gmra.mxu0 %v82
    %v126 = vpop.f32.mrf.mxu0
    %v127 = vadd.f32 %v63, %v126
    %128 = vmatmul.f32.gmra.mxu0 %v85
    %v129 = vpop.f32.mrf.mxu0
    %v130 = vadd.f32 %v63, %v129
    %131 = vmatmul.f32.gmra.mxu0 %v88
    %v132 = vpop.f32.mrf.mxu0
    %v133 = vadd.f32 %v63, %v132
    %134 = vdwg.mxu0
    %135 = vst [vmem:[#allocation3] sm:$0xff] %v112
    %136 = vst [vmem:[#allocation3 + $0x8] sm:$0xff] %v115
    %137 = vst [vmem:[#allocation3 + $0x10] sm:$0xff] %v118
    %138 = vst [vmem:[#allocation3 + $0x18] sm:$0xff] %v121
    %139 = vst [vmem:[#allocation3 + $0x20] sm:$0xff] %v124
    %140 = vst [vmem:[#allocation3 + $0x28] sm:$0xff] %v127
    %141 = vst [vmem:[#allocation3 + $0x30] sm:$0xff] %v130
    %142 = vst [vmem:[#allocation3 + $0x38] sm:$0xff] %v133
    %v143 = vld [vmem:[#allocation2] sm:$0xff]
    %v144 = vld [vmem:[#allocation4] sm:$0xff]
    %v145 = vld [vmem:[#allocation4 + $0x8] sm:$0xff]
    %v146 = vld [vmem:[#allocation4 + $0x10] sm:$0xff]
    %v147 = vld [vmem:[#allocation4 + $0x18] sm:$0xff]
    %v148 = vld [vmem:[#allocation4 + $0x20] sm:$0xff]
    %v149 = vld [vmem:[#allocation4 + $0x28] sm:$0xff]
    %v150 = vld [vmem:[#allocation4 + $0x30] sm:$0xff]
    %v151 = vld [vmem:[#allocation4 + $0x38] sm:$0xff]
    %v152 = vld [vmem:[#allocation4 + $0x40] sm:$0xff]
    %v153 = vld [vmem:[#allocation4 + $0x48] sm:$0xff]
    %v154 = vld [vmem:[#allocation4 + $0x50] sm:$0xff]
    %v155 = vld [vmem:[#allocation4 + $0x58] sm:$0xff]
    %v156 = vld [vmem:[#allocation4 + $0x60] sm:$0xff]
    %v157 = vld [vmem:[#allocation4 + $0x68] sm:$0xff]
    %v158 = vld [vmem:[#allocation4 + $0x70] sm:$0xff]
    %v159 = vld [vmem:[#allocation4 + $0x78] sm:$0xff]
    %v160 = vld [vmem:[%s5] sm:$0x1]
    %v162 = vperm.slane %v160, 0
    %v164 = vld [vmem:[#allocation3] sm:$0xff]
    %165 = vmatpush.msra.mxu0 %v159
    %166 = vmatpush.msra.mxu0 %v158
    %167 = vmatpush.msra.mxu0 %v157
    %168 = vmatpush.msra.mxu0 %v156
    %169 = vmatpush.msra.mxu0 %v155
    %170 = vmatpush.msra.mxu0 %v154
    %171 = vmatpush.msra.mxu0 %v153
    %172 = vmatpush.msra.mxu0 %v152
    %173 = vmatpush.msra.mxu0 %v151
    %174 = vmatpush.msra.mxu0 %v150
    %175 = vmatpush.msra.mxu0 %v149
    %176 = vmatpush.msra.mxu0 %v148
    %177 = vmatpush.msra.mxu0 %v147
    %178 = vmatpush.msra.mxu0 %v146
    %179 = vmatpush.msra.mxu0 %v145
    %180 = vmatpush.msra.mxu0 %v144
    %181 = vmatmul.f32.gmra.mxu0 %v143
    %v182 = vpop.f32.mrf.mxu0
    %v183 = vadd.f32 0.0, %v182
    %184 = vdwg.mxu0
    %v185 = vadd.f32 %v164, %v183
    %v186 = vtanh.pop %v185
    %v187 = vmul.f32 %v186, %v162
    %188 = vst [vmem:[#allocation7] sm:$0xff] %v187
    %s189 = scalar_lea.vmem [#allocation3], 8
    %v190 = vld [vmem:[%s189] sm:$0xff]
    %191 = vmatpush.msra.mxu0 %v159
    %192 = vmatpush.msra.mxu0 %v158
    %193 = vmatpush.msra.mxu0 %v157
    %194 = vmatpush.msra.mxu0 %v156
    %195 = vmatpush.msra.mxu0 %v155
    %196 = vmatpush.msra.mxu0 %v154
    %197 = vmatpush.msra.mxu0 %v153
    %198 = vmatpush.msra.mxu0 %v152
    %199 = vmatpush.msra.mxu0 %v151
    %200 = vmatpush.msra.mxu0 %v150
    %201 = vmatpush.msra.mxu0 %v149
    %202 = vmatpush.msra.mxu0 %v148
    %203 = vmatpush.msra.mxu0 %v147
    %204 = vmatpush.msra.mxu0 %v146
    %205 = vmatpush.msra.mxu0 %v145
    %206 = vmatpush.msra.mxu0 %v144
    %207 = vmatmul.f32.gmra.mxu0 %v186
    %v208 = vpop.f32.mrf.mxu0
    %v209 = vadd.f32 0.0, %v208
    %210 = vdwg.mxu0
    %v211 = vadd.f32 %v190, %v209
    %v212 = vtanh.pop %v211
    %v213 = vmul.f32 %v212, %v162
    %s214 = scalar_lea.vmem [#allocation7], 8
    %215 = vst [vmem:[%s214] sm:$0xff] %v213
    %s216 = scalar_lea.vmem [#allocation3], 16
    %v217 = vld [vmem:[%s216] sm:$0xff]
    %218 = vmatpush.msra.mxu0 %v159
    %219 = vmatpush.msra.mxu0 %v158
    %220 = vmatpush.msra.mxu0 %v157
    %221 = vmatpush.msra.mxu0 %v156
    %222 = vmatpush.msra.mxu0 %v155
    %223 = vmatpush.msra.mxu0 %v154
    %224 = vmatpush.msra.mxu0 %v153
    %225 = vmatpush.msra.mxu0 %v152
    %226 = vmatpush.msra.mxu0 %v151
    %227 = vmatpush.msra.mxu0 %v150
    %228 = vmatpush.msra.mxu0 %v149
    %229 = vmatpush.msra.mxu0 %v148
    %230 = vmatpush.msra.mxu0 %v147
    %231 = vmatpush.msra.mxu0 %v146
    %232 = vmatpush.msra.mxu0 %v145
    %233 = vmatpush.msra.mxu0 %v144
    %234 = vmatmul.f32.gmra.mxu0 %v212
    %v235 = vpop.f32.mrf.mxu0
    %v236 = vadd.f32 0.0, %v235
    %237 = vdwg.mxu0
    %v238 = vadd.f32 %v217, %v236
    %v239 = vtanh.pop %v238
    %v240 = vmul.f32 %v239, %v162
    %s241 = scalar_lea.vmem [#allocation7], 16
    %242 = vst [vmem:[%s241] sm:$0xff] %v240
    %s243 = scalar_lea.vmem [#allocation3], 24
    %v244 = vld [vmem:[%s243] sm:$0xff]
    %245 = vmatpush.msra.mxu0 %v159
    %246 = vmatpush.msra.mxu0 %v158
    %247 = vmatpush.msra.mxu0 %v157
    %248 = vmatpush.msra.mxu0 %v156
    %249 = vmatpush.msra.mxu0 %v155
    %250 = vmatpush.msra.mxu0 %v154
    %251 = vmatpush.msra.mxu0 %v153
    %252 = vmatpush.msra.mxu0 %v152
    %253 = vmatpush.msra.mxu0 %v151
    %254 = vmatpush.msra.mxu0 %v150
    %255 = vmatpush.msra.mxu0 %v149
    %256 = vmatpush.msra.mxu0 %v148
    %257 = vmatpush.msra.mxu0 %v147
    %258 = vmatpush.msra.mxu0 %v146
    %259 = vmatpush.msra.mxu0 %v145
    %260 = vmatpush.msra.mxu0 %v144
    %261 = vmatmul.f32.gmra.mxu0 %v239
    %v262 = vpop.f32.mrf.mxu0
    %v263 = vadd.f32 0.0, %v262
    %264 = vdwg.mxu0
    %v265 = vadd.f32 %v244, %v263
    %v266 = vtanh.pop %v265
    %v267 = vmul.f32 %v266, %v162
    %s268 = scalar_lea.vmem [#allocation7], 24
    %269 = vst [vmem:[%s268] sm:$0xff] %v267
    %s270 = scalar_lea.vmem [#allocation3], 32
    %v271 = vld [vmem:[%s270] sm:$0xff]
    %272 = vmatpush.msra.mxu0 %v159
    %273 = vmatpush.msra.mxu0 %v158
    %274 = vmatpush.msra.mxu0 %v157
    %275 = vmatpush.msra.mxu0 %v156
    %276 = vmatpush.msra.mxu0 %v155
    %277 = vmatpush.msra.mxu0 %v154
    %278 = vmatpush.msra.mxu0 %v153
    %279 = vmatpush.msra.mxu0 %v152
    %280 = vmatpush.msra.mxu0 %v151
    %281 = vmatpush.msra.mxu0 %v150
    %282 = vmatpush.msra.mxu0 %v149
    %283 = vmatpush.msra.mxu0 %v148
    %284 = vmatpush.msra.mxu0 %v147
    %285 = vmatpush.msra.mxu0 %v146
    %286 = vmatpush.msra.mxu0 %v145
    %287 = vmatpush.msra.mxu0 %v144
    %288 = vmatmul.f32.gmra.mxu0 %v266
    %v289 = vpop.f32.mrf.mxu0
    %v290 = vadd.f32 0.0, %v289
    %291 = vdwg.mxu0
    %v292 = vadd.f32 %v271, %v290
    %v293 = vtanh.pop %v292
    %v294 = vmul.f32 %v293, %v162
    %s295 = scalar_lea.vmem [#allocation7], 32
    %296 = vst [vmem:[%s295] sm:$0xff] %v294
    %s297 = scalar_lea.vmem [#allocation3], 40
    %v298 = vld [vmem:[%s297] sm:$0xff]
    %299 = vmatpush.msra.mxu0 %v159
    %300 = vmatpush.msra.mxu0 %v158
    %301 = vmatpush.msra.mxu0 %v157
    %302 = vmatpush.msra.mxu0 %v156
    %303 = vmatpush.msra.mxu0 %v155
    %304 = vmatpush.msra.mxu0 %v154
    %305 = vmatpush.msra.mxu0 %v153
    %306 = vmatpush.msra.mxu0 %v152
    %307 = vmatpush.msra.mxu0 %v151
    %308 = vmatpush.msra.mxu0 %v150
    %309 = vmatpush.msra.mxu0 %v149
    %310 = vmatpush.msra.mxu0 %v148
    %311 = vmatpush.msra.mxu0 %v147
    %312 = vmatpush.msra.mxu0 %v146
    %313 = vmatpush.msra.mxu0 %v145
    %314 = vmatpush.msra.mxu0 %v144
    %315 = vmatmul.f32.gmra.mxu0 %v293
    %v316 = vpop.f32.mrf.mxu0
    %v317 = vadd.f32 0.0, %v316
    %318 = vdwg.mxu0
    %v319 = vadd.f32 %v298, %v317
    %v320 = vtanh.pop %v319
    %v321 = vmul.f32 %v320, %v162
    %s322 = scalar_lea.vmem [#allocation7], 40
    %323 = vst [vmem:[%s322] sm:$0xff] %v321
    %s324 = scalar_lea.vmem [#allocation3], 48
    %v325 = vld [vmem:[%s324] sm:$0xff]
    %326 = vmatpush.msra.mxu0 %v159
    %327 = vmatpush.msra.mxu0 %v158
    %328 = vmatpush.msra.mxu0 %v157
    %329 = vmatpush.msra.mxu0 %v156
    %330 = vmatpush.msra.mxu0 %v155
    %331 = vmatpush.msra.mxu0 %v154
    %332 = vmatpush.msra.mxu0 %v153
    %333 = vmatpush.msra.mxu0 %v152
    %334 = vmatpush.msra.mxu0 %v151
    %335 = vmatpush.msra.mxu0 %v150
    %336 = vmatpush.msra.mxu0 %v149
    %337 = vmatpush.msra.mxu0 %v148
    %338 = vmatpush.msra.mxu0 %v147
    %339 = vmatpush.msra.mxu0 %v146
    %340 = vmatpush.msra.mxu0 %v145
    %341 = vmatpush.msra.mxu0 %v144
    %342 = vmatmul.f32.gmra.mxu0 %v320
    %v343 = vpop.f32.mrf.mxu0
    %v344 = vadd.f32 0.0, %v343
    %345 = vdwg.mxu0
    %v346 = vadd.f32 %v325, %v344
    %v347 = vtanh.pop %v346
    %v348 = vmul.f32 %v347, %v162
    %s349 = scalar_lea.vmem [#allocation7], 48
    %350 = vst [vmem:[%s349] sm:$0xff] %v348
    %s351 = scalar_lea.vmem [#allocation3], 56
    %v352 = vld [vmem:[%s351] sm:$0xff]
    %353 = vmatpush.msra.mxu0 %v159
    %354 = vmatpush.msra.mxu0 %v158
    %355 = vmatpush.msra.mxu0 %v157
    %356 = vmatpush.msra.mxu0 %v156
    %357 = vmatpush.msra.mxu0 %v155
    %358 = vmatpush.msra.mxu0 %v154
    %359 = vmatpush.msra.mxu0 %v153
    %360 = vmatpush.msra.mxu0 %v152
    %361 = vmatpush.msra.mxu0 %v151
    %362 = vmatpush.msra.mxu0 %v150
    %363 = vmatpush.msra.mxu0 %v149
    %364 = vmatpush.msra.mxu0 %v148
    %365 = vmatpush.msra.mxu0 %v147
    %366 = vmatpush.msra.mxu0 %v146
    %367 = vmatpush.msra.mxu0 %v145
    %368 = vmatpush.msra.mxu0 %v144
    %369 = vmatmul.f32.gmra.mxu0 %v347
    %v370 = vpop.f32.mrf.mxu0
    %v371 = vadd.f32 0.0, %v370
    %372 = vdwg.mxu0
    %v373 = vadd.f32 %v352, %v371
    %v374 = vtanh.pop %v373
    %v375 = vmul.f32 %v374, %v162
    %s376 = scalar_lea.vmem [#allocation7], 56
    %377 = vst [vmem:[%s376] sm:$0xff] %v375
    %378 = vst [vmem:[#allocation2] sm:$0xff] %v374
    // Predicated region
    $region38: #{tpu_custom_call.1} parent=1 // pred_check
      %p379 = pneg %p46
    $region39: #{tpu_custom_call.1} parent=1 // pred_check_branch
      %381 = sbr.rel (%p379) target = $region41
    $region40: #{tpu_custom_call.1} parent=1 // pred_region
      %v382 = vld [vmem:[%s6] sm:$0x1]
      %v384 = vperm.slane %v382, 0
      %v386 = vmul.f32 %v374, %v384
      %387 = vst [vmem:[#allocation8] sm:$0xff] %v386
    $region41: #{tpu_custom_call.1} parent=1 // pred_fallthru
      _
    // Predicated region
    $region42: #{tpu_custom_call.1} parent=1 // pred_check
      _
    $region43: #{tpu_custom_call.1} parent=1 // pred_check_branch
      %389 = sbr.rel (0) target = $region45
    $region44: #{tpu_custom_call.1} parent=1 // pred_region
      %391 = vsyncadd [#allocation6], 0
      %s392 = sshll.u32 [#allocation7], 4
      %s393 = int_to_ptr.vmem [resolvable:$true] %s392
      %s394 = sshll.u32 %s7, 4
      %s395 = int_to_ptr.hbm [resolvable:$true] %s394
      %400 = dma.vmem_to_hbm [thread:$0]  %s393, 1024, %s395, [#allocation6], 128, 128, 8
    $region45: #{tpu_custom_call.1} parent=1 // pred_fallthru
      _
    // Predicated region
    $region46: #{tpu_custom_call.1} parent=1 // pred_check
      _
    $region47: #{tpu_custom_call.1} parent=1 // pred_check_branch
      %402 = sbr.rel (0) target = $region49
    $region48: #{tpu_custom_call.1} parent=1 // pred_region
      %404 = vsyncadd [#allocation9], 0
      %s406 = sshll.u32 [#allocation8], 4
      %s407 = int_to_ptr.vmem [resolvable:$true] %s406
      %s408 = sshll.u32 %s8, 4
      %s409 = int_to_ptr.hbm [resolvable:$true] %s408
      %411 = dma.vmem_to_hbm [thread:$0]  %s407, 128, %s409, [#allocation9]
    $region49: #{tpu_custom_call.1} parent=1 // pred_fallthru
      _
    // Predicated region
    $region50: #{tpu_custom_call.1} parent=1 // pred_check
      _
    $region51: #{tpu_custom_call.1} parent=1 // pred_check_branch
      %413 = sbr.rel (0) target = $region53
    $region52: #{tpu_custom_call.1} parent=1 // pred_region
      %415 = dma.done [#allocation6], 1024
    $region53: #{tpu_custom_call.1} parent=1 // pred_fallthru
      _
    // Predicated region
    $region54: #{tpu_custom_call.1} parent=1 // pred_check
      _
    $region55: #{tpu_custom_call.1} parent=1 // pred_check_branch
      %417 = sbr.rel (0) target = $region57
    $region56: #{tpu_custom_call.1} parent=1 // pred_region
      %419 = dma.done [#allocation9], 128
    $region57: #{tpu_custom_call.1} parent=1 // pred_fallthru
      _
    %420 = vsyncpa [#allocation5], 1
    %421 = vsyncpa [#allocation6], 1
    %422 = vsyncpa [#allocation9], 1

</llo_original>
